<compile_context>
chip_gen: v7x
topology: tpu7x:2x2x1
jax: 0.10.0
libtpu: 0.0.40
codegen_flags: <defaults>
</compile_context>

<pallas_src>
import functools
import math
from typing import NamedTuple, Optional

import jax
import jax.numpy as jnp
from jax.experimental import pallas as pl
from jax.experimental.pallas import tpu as pltpu


def _round_up(x, m):
    return ((x + m - 1) // m) * m


def _sublane_align(dtype):
    # Minimum second-to-last-dim alignment for this dtype's vreg packing:
    # f32 -> 8, bf16 -> 16, int8/fp8 -> 32.
    return max(8, 32 // max(jnp.dtype(dtype).itemsize, 1))


def _pick_tile(dim, preferred, align):
    # Preferred tile size, shrunk (to an `align` multiple) when the whole dim
    # fits in less than one preferred tile (avoids padding tiny problems).
    return min(preferred, _round_up(max(dim, 1), align))


def _padded_extent(dim, tile, align):
    # Pad `dim` so the chosen tile divides it exactly.
    return _round_up(_round_up(max(dim, 1), align), tile)


# ----------------------------------------------------------------------------
# Kernels
# ----------------------------------------------------------------------------

def _mlp_kernel_fused_out(x_ref, w_ref, b_ref, o_ref, *, activation):
    # x_ref : (tm, tk)   input tile (compute dtype, e.g. bf16)
    # w_ref : (tk, tn)   pre-transposed weight tile
    # b_ref : (1,  tn)   f32 bias tile (zeros if the layer has no bias)
    # o_ref : (tm, tn)   f32 output tile; doubles as the accumulator because
    #                    its block index is constant across the K axis.
    k = pl.program_id(2)
    prod = jnp.dot(x_ref[...], w_ref[...], preferred_element_type=jnp.float32)

    @pl.when(k == 0)
    def _():
        o_ref[...] = prod            # first K step: write (no zero-fill pass)

    @pl.when(k != 0)
    def _():
        o_ref[...] += prod

    @pl.when(k == pl.num_programs(2) - 1)
    def _():
        out = o_ref[...] + b_ref[...]
        if activation == "relu":
            out = jnp.maximum(out, 0.0)
        o_ref[...] = out


def _mlp_kernel_scratch_acc(x_ref, w_ref, b_ref, o_ref, acc_ref, *, activation):
    # Variant for narrow output dtypes: accumulate in an f32 VMEM scratch and
    # cast once in the epilogue.
    k = pl.program_id(2)
    prod = jnp.dot(x_ref[...], w_ref[...], preferred_element_type=jnp.float32)

    @pl.when(k == 0)
    def _():
        acc_ref[...] = prod

    @pl.when(k != 0)
    def _():
        acc_ref[...] += prod

    @pl.when(k == pl.num_programs(2) - 1)
    def _():
        out = acc_ref[...] + b_ref[...]
        if activation == "relu":
            out = jnp.maximum(out, 0.0)
        o_ref[...] = out.astype(o_ref.dtype)


# ----------------------------------------------------------------------------
# One-time parameter prep (hoisted out of the per-call forward)
# ----------------------------------------------------------------------------

class PreparedMLPParams(NamedTuple):
    w_t: jax.Array    # (kp, np_) pre-transposed, padded, cast to compute dtype
    b2: jax.Array     # (1, np_) float32 bias (zeros when bias is None)
    d_in: int
    d_out: int
    tk: int           # effective K tile (divides kp, multiple of 128)
    tn: int           # effective N tile (divides np_, multiple of 128)


def prepare_mlp_params(weight, bias=None, *, tn=512, tk=512,
                       compute_dtype=jnp.bfloat16):
    """Transpose, pad and cast the nn.Linear weight/bias once (not per call)."""
    d_out, d_in = weight.shape
    compute_dtype = weight.dtype if compute_dtype is None else compute_dtype

    tk_eff = _pick_tile(d_in, tk, 128)
    tn_eff = _pick_tile(d_out, tn, 128)
    kp = _padded_extent(d_in, tk_eff, 128)
    np_ = _padded_extent(d_out, tn_eff, 128)

    w_t = weight.T.astype(compute_dtype)                  # (d_in, d_out)
    if (kp, np_) != (d_in, d_out):
        w_t = jnp.pad(w_t, ((0, kp - d_in), (0, np_ - d_out)))

    if bias is None:
        b2 = jnp.zeros((1, np_), dtype=jnp.float32)
    else:
        b2 = bias.reshape(1, d_out).astype(jnp.float32)
        if np_ != d_out:
            b2 = jnp.pad(b2, ((0, 0), (0, np_ - d_out)))

    return PreparedMLPParams(w_t=w_t, b2=b2, d_in=d_in, d_out=d_out,
                             tk=tk_eff, tn=tn_eff)


# ----------------------------------------------------------------------------
# Forward
# ----------------------------------------------------------------------------

def nonlinear_mlp_forward(x, params: PreparedMLPParams, *, activation="relu",
                          tm=512, out_dtype=None,
                          weight_buffer_count: Optional[int] = None):
    """activation(x @ W.T + b) with a fused Pallas matmul+bias+activation.

    x      : (..., D_in)      arbitrary leading dims
    params : PreparedMLPParams from prepare_mlp_params (weight already
             transposed / padded / cast once).
    """
    # TODO(synk): arbitrary callable activations from the PyTorch module are
    # not fused; only 'relu' and 'identity'/None are supported in-kernel.
    if activation is None:
        activation = "identity"
    if activation not in ("relu", "identity"):
        raise ValueError(
            f"unsupported activation {activation!r}; expected 'relu', "
            "'identity', or None")

    orig_lead = x.shape[:-1]
    d_in = x.shape[-1]
    if d_in != params.d_in:
        raise ValueError(f"x last dim {d_in} != prepared d_in {params.d_in}")
    d_out = params.d_out
    out_dtype = x.dtype if out_dtype is None else jnp.dtype(out_dtype)
    compute_dtype = params.w_t.dtype

    m = int(math.prod(orig_lead)) if orig_lead else 1
    x2 = x.reshape(m, d_in)
    if x2.dtype != compute_dtype:
        x2 = x2.astype(compute_dtype)

    kp, np_ = params.w_t.shape
    tk, tn = params.tk, params.tn
    m_align = _sublane_align(compute_dtype)
    tm_eff = _pick_tile(m, tm, m_align)
    mp = _padded_extent(m, tm_eff, m_align)

    # Conditional pad: skipped entirely when the activation is already aligned.
    if (mp, kp) != (m, d_in):
        x2 = jnp.pad(x2, ((0, mp - m), (0, kp - d_in)))

    grid = (mp // tm_eff, np_ // tn, kp // tk)

    # Weight traffic scales as (M/tm)*|W|; the large default tm keeps
    # re-streaming low without needing a fully weight-resident variant.
    if weight_buffer_count is None:
        w_spec = pl.BlockSpec((tk, tn), lambda i, j, k: (k, j))
    else:
        # Optional deeper K-stream buffering (e.g. 3 on v5e if DMA is exposed).
        w_spec = pl.BlockSpec((tk, tn), lambda i, j, k: (k, j),
                              pipeline_mode=pl.Buffered(weight_buffer_count))

    in_specs = [
        pl.BlockSpec((tm_eff, tk), lambda i, j, k: (i, k)),
        w_spec,
        pl.BlockSpec((1, tn), lambda i, j, k: (0, j)),
    ]
    out_spec = pl.BlockSpec((tm_eff, tn), lambda i, j, k: (i, j))

    if out_dtype == jnp.float32:
        # Accumulate directly into the (resident) f32 output block: no scratch.
        kernel = functools.partial(_mlp_kernel_fused_out, activation=activation)
        scratch_shapes = []
    else:
        kernel = functools.partial(_mlp_kernel_scratch_acc,
                                   activation=activation)
        scratch_shapes = [pltpu.VMEM((tm_eff, tn), jnp.float32)]

    out = pl.pallas_call(
        kernel,
        out_shape=jax.ShapeDtypeStruct((mp, np_), out_dtype),
        grid_spec=pltpu.PrefetchScalarGridSpec(
            num_scalar_prefetch=0,
            grid=grid,
            in_specs=in_specs,
            out_specs=out_spec,
            scratch_shapes=scratch_shapes,
        ),
        compiler_params=pltpu.CompilerParams(
            dimension_semantics=("parallel", "parallel", "arbitrary"),
            vmem_limit_bytes=48 * 1024 * 1024,
        ),
    )(x2, params.w_t, params.b2)

    out = out[:m, :d_out]
    return out.reshape(orig_lead + (d_out,))


def nonlinear_mlp(x, weight, bias=None, *, activation="relu",
                  tm=512, tn=512, tk=512, compute_dtype=jnp.bfloat16):
    """Convenience one-shot wrapper (preps params then runs the kernel)."""
    params = prepare_mlp_params(weight, bias, tn=tn, tk=tk,
                                compute_dtype=compute_dtype)
    return nonlinear_mlp_forward(x, params, activation=activation, tm=tm)


# ----------------------------------------------------------------------------
# Pure-JAX reference (transcription of the PyTorch forward)
# ----------------------------------------------------------------------------

def _reference_mlp(x, weight, bias=None, *, activation="relu"):
    out = jnp.einsum("...i,oi->...o", x, weight)
    if bias is not None:
        out = out + bias
    if activation == "relu":
        out = jnp.maximum(out, 0.0)
    return out


if __name__ == "__main__":
    key = jax.random.PRNGKey(0)
    kx, kw, kb, kx2, kw2, kb2 = jax.random.split(key, 6)

    # ---- Test 1: module-shaped small case, default bf16 MXU compute --------
    B, S, D_IN, D_OUT = 2, 8, 32, 32
    x = jax.random.normal(kx, (B, S, D_IN), dtype=jnp.float32)
    bound = 1.0 / math.sqrt(D_IN)
    weight = jax.random.uniform(kw, (D_OUT, D_IN), dtype=jnp.float32,
                                minval=-bound, maxval=bound)
    bias = jax.random.uniform(kb, (D_OUT,), dtype=jnp.float32,
                              minval=-bound, maxval=bound)

    params = prepare_mlp_params(weight, bias)            # one-time prep (bf16)
    out = jax.block_until_ready(
        nonlinear_mlp_forward(x, params, activation="relu"))
    assert out.shape == (B, S, D_OUT), out.shape
    assert out.dtype == jnp.float32, out.dtype

    # Apples-to-apples reference: same bf16-rounded operands, f32 accumulation.
    ref_bf16 = _reference_mlp(
        x.astype(jnp.bfloat16).astype(jnp.float32),
        weight.astype(jnp.bfloat16).astype(jnp.float32),
        bias, activation="relu")
    assert jnp.allclose(out, ref_bf16, atol=1e-4, rtol=1e-4), \
        "mismatch vs bf16-operand reference"
    # Sanity vs the exact f32 reference at bf16-level tolerance.
    ref_f32 = _reference_mlp(x, weight, bias, activation="relu")
    assert jnp.allclose(out, ref_f32, atol=3e-2, rtol=3e-2), \
        "mismatch vs f32 reference (beyond bf16 tolerance)"

    # ---- Test 2: f32 compute path, no bias, identity activation ------------
    out2 = jax.block_until_ready(
        nonlinear_mlp(x, weight, None, activation="identity",
                      compute_dtype=None))
    ref2 = _reference_mlp(x, weight, None, activation="identity")
    assert jnp.allclose(out2, ref2, atol=2e-2, rtol=2e-2), \
        "mismatch (no-bias / identity / f32 path)"

    # ---- Test 3: multi-tile grid (exercises K-axis accumulation) -----------
    B2, S2, D_IN2, D_OUT2 = 4, 64, 384, 256
    x3 = jax.random.normal(kx2, (B2, S2, D_IN2), dtype=jnp.float32)
    bound2 = 1.0 / math.sqrt(D_IN2)
    weight3 = jax.random.uniform(kw2, (D_OUT2, D_IN2), dtype=jnp.float32,
                                 minval=-bound2, maxval=bound2)
    bias3 = jax.random.uniform(kb2, (D_OUT2,), dtype=jnp.float32,
                               minval=-bound2, maxval=bound2)
    params3 = prepare_mlp_params(weight3, bias3, tn=128, tk=128)
    out3 = jax.block_until_ready(
        nonlinear_mlp_forward(x3, params3, activation="relu", tm=128))
    ref3 = _reference_mlp(
        x3.astype(jnp.bfloat16).astype(jnp.float32),
        weight3.astype(jnp.bfloat16).astype(jnp.float32),
        bias3, activation="relu")
    assert out3.shape == (B2, S2, D_OUT2), out3.shape
    assert jnp.allclose(out3, ref3, atol=1e-3, rtol=1e-3), \
        "mismatch (multi-tile / K-accumulation path)"

    print("KERNEL_OK")
</pallas_src>

<mosaic_0001>
module attributes {stable_mosaic.version = 11 : i64} {
  func.func @_mlp_kernel_fused_out(%arg0: i32, %arg1: i32, %arg2: i32, %arg3: memref<16x128xbf16, #tpu.memory_space<vmem>>, %arg4: memref<128x128xbf16, #tpu.memory_space<vmem>>, %arg5: memref<1x128xf32, #tpu.memory_space<vmem>>, %arg6: memref<16x128xf32, #tpu.memory_space<vmem>>) attributes {dimension_semantics = [#tpu.dimension_semantics<parallel>, #tpu.dimension_semantics<parallel>, #tpu.dimension_semantics<arbitrary>], iteration_bounds = array<i64: 1, 1, 1>, scalar_prefetch = 0 : i64, scratch_operands = 0 : i64, tpu.core_type = #tpu.core_type<tc>, window_params = [{transform_indices = @transform_0, window_bounds = array<i64: 16, 128>}, {transform_indices = @transform_1, window_bounds = array<i64: 128, 128>}, {transform_indices = @transform_2, window_bounds = array<i64: 1, 128>}, {transform_indices = @transform_3, window_bounds = array<i64: 16, 128>}]} {
    %c0 = arith.constant 0 : index
    %c0_0 = arith.constant 0 : index
    %0 = vector.load %arg3[%c0, %c0_0] : memref<16x128xbf16, #tpu.memory_space<vmem>>, vector<16x128xbf16>
    %c0_1 = arith.constant 0 : index
    %c0_2 = arith.constant 0 : index
    %1 = vector.load %arg4[%c0_1, %c0_2] : memref<128x128xbf16, #tpu.memory_space<vmem>>, vector<128x128xbf16>
    %cst = arith.constant dense<0.000000e+00> : vector<16x128xf32>
    %2 = tpu.matmul %0, %1, %cst {dimension_numbers = #tpu.dot_dimension_numbers<[1], [0], [0], [1], [0, 0, 1, 1], [], []>} : vector<16x128xbf16>, vector<128x128xbf16>, vector<16x128xf32> -> vector<16x128xf32>
    %c0_i32 = arith.constant 0 : i32
    %3 = arith.cmpi eq, %arg2, %c0_i32 : i32
    %4 = arith.extui %3 : i1 to i32
    %c0_i32_3 = arith.constant 0 : i32
    %5 = arith.cmpi ne, %4, %c0_i32_3 : i32
    scf.if %5 {
      %c0_8 = arith.constant 0 : index
      %c0_9 = arith.constant 0 : index
      %12 = vector.load %arg6[%c0_8, %c0_9] : memref<16x128xf32, #tpu.memory_space<vmem>>, vector<16x128xf32>
      tpu.vector_store %arg6[%c0_8, %c0_9], %2 {strides = array<i32>} : memref<16x128xf32, #tpu.memory_space<vmem>>, vector<16x128xf32>,
    } else {
    }
    %c0_i32_4 = arith.constant 0 : i32
    %6 = arith.cmpi ne, %arg2, %c0_i32_4 : i32
    %7 = arith.extui %6 : i1 to i32
    %c0_i32_5 = arith.constant 0 : i32
    %8 = arith.cmpi ne, %7, %c0_i32_5 : i32
    scf.if %8 {
      %c0_8 = arith.constant 0 : index
      %c0_9 = arith.constant 0 : index
      %12 = vector.load %arg6[%c0_8, %c0_9] : memref<16x128xf32, #tpu.memory_space<vmem>>, vector<16x128xf32>
      %13 = arith.addf %12, %2 : vector<16x128xf32>
      %c0_10 = arith.constant 0 : index
      %c0_11 = arith.constant 0 : index
      %14 = vector.load %arg6[%c0_10, %c0_11] : memref<16x128xf32, #tpu.memory_space<vmem>>, vector<16x128xf32>
      tpu.vector_store %arg6[%c0_10, %c0_11], %13 {strides = array<i32>} : memref<16x128xf32, #tpu.memory_space<vmem>>, vector<16x128xf32>,
    } else {
    }
    %c0_i32_6 = arith.constant 0 : i32
    %9 = arith.cmpi eq, %arg2, %c0_i32_6 : i32
    %10 = arith.extui %9 : i1 to i32
    %c0_i32_7 = arith.constant 0 : i32
    %11 = arith.cmpi ne, %10, %c0_i32_7 : i32
    scf.if %11 {
      %c0_8 = arith.constant 0 : index
      %c0_9 = arith.constant 0 : index
      %12 = vector.load %arg6[%c0_8, %c0_9] : memref<16x128xf32, #tpu.memory_space<vmem>>, vector<16x128xf32>
      %c0_10 = arith.constant 0 : index
      %c0_11 = arith.constant 0 : index
      %13 = vector.load %arg5[%c0_10, %c0_11] : memref<1x128xf32, #tpu.memory_space<vmem>>, vector<1x128xf32>
      %14 = vector.broadcast %13 : vector<1x128xf32> to vector<16x128xf32>
      %15 = arith.addf %12, %14 : vector<16x128xf32>
      %cst_12 = arith.constant 0.000000e+00 : f32
      %16 = vector.broadcast %cst_12 : f32 to vector<16x128xf32>
      %17 = arith.maximumf %15, %16 : vector<16x128xf32>
      %c0_13 = arith.constant 0 : index
      %c0_14 = arith.constant 0 : index
      %18 = vector.load %arg6[%c0_13, %c0_14] : memref<16x128xf32, #tpu.memory_space<vmem>>, vector<16x128xf32>
      tpu.vector_store %arg6[%c0_13, %c0_14], %17 {strides = array<i32>} : memref<16x128xf32, #tpu.memory_space<vmem>>, vector<16x128xf32>,
    } else {
    }
    return
  }
  func.func @transform_0(%arg0: i32, %arg1: i32, %arg2: i32) -> (i32, i32) {
    %c0_i32 = arith.constant 0 : i32
    return %arg0, %arg2 : i32, i32
  }
  func.func @transform_1(%arg0: i32, %arg1: i32, %arg2: i32) -> (i32, i32) {
    %c0_i32 = arith.constant 0 : i32
    return %arg2, %arg1 : i32, i32
  }
  func.func @transform_2(%arg0: i32, %arg1: i32, %arg2: i32) -> (i32, i32) {
    %c0_i32 = arith.constant 0 : i32
    %c0_i32_0 = arith.constant 0 : i32
    return %c0_i32, %arg1 : i32, i32
  }
  func.func @transform_3(%arg0: i32, %arg1: i32, %arg2: i32) -> (i32, i32) {
    %c0_i32 = arith.constant 0 : i32
    return %arg0, %arg1 : i32, i32
  }
}

</mosaic_0001>

<llo_original>
// kernel: tpu_custom_call.1
$region0: #{tpu_custom_call.1}
  #allocation0 [shape = 'u32[]', space=smem, size = 0x4, offset = 0x4, fixed_abs, tag = 'smem constant byte address 0x4 - core index']
  #allocation1 [shape = 'u32[144,128]{1,0:T(1,128)}', space=vmem, size = 0x12000, scoped, tag = 'internal scratch']
  %s0 = inlined_call_operand.hbm [shape: bf16[16,128], index: 0, kind: input, shape index: {}]
  %s1 = inlined_call_operand.hbm [shape: bf16[128,128], index: 1, kind: input, shape index: {}]
  %s2 = inlined_call_operand.vmem [shape: f32[1,128], index: 2, kind: input, shape index: {}]
  %s3 = inlined_call_operand.hbm [shape: f32[16,128], index: 3, kind: output, shape index: {}]
  %s4 = sld [smem:[#allocation0]]
  $region42: #{tpu_custom_call.1} parent=0
    _
  %s6 = ssub.s32 1, %s4
  %s7 = scalar_select 0, %s6, %s4
  $region1: #{tpu_custom_call.1} parent=0
    #allocation2 [shape = 'u8[4096]{0}', space=vmem, size = 0x1000, scoped, tag = 'input window, operand 0, single buffered']
    #allocation3 [shape = 's32[1]{0}', space=sflag, size = 0x4, scoped, tag = 'scoped memory for tpu_custom_call.1']
    #allocation4 [shape = 's32[1]{0}', space=sflag, size = 0x4, scoped, tag = 'scoped memory for tpu_custom_call.1']
    #allocation5 [shape = 'u8[32768]{0}', space=vmem, size = 0x8000, scoped, tag = 'input window, operand 1, single buffered']
    #allocation6 [shape = 's32[1]{0}', space=sflag, size = 0x4, scoped, tag = 'scoped memory for tpu_custom_call.1']
    #allocation7 [shape = 'u8[8192]{0}', space=vmem, size = 0x2000, scoped, tag = 'output window, operand 0, single buffered']
    %8 = vsyncpa [#allocation3], 0
    %9 = vsyncpa [#allocation6], 0
    %10 = vsyncpa [#allocation4], 0
    // Predicated region
    $region2: #{tpu_custom_call.1} parent=1 // pred_check
      _
    $region3: #{tpu_custom_call.1} parent=1 // pred_check_branch
      %12 = sbr.rel (0) target = $region5
    $region4: #{tpu_custom_call.1} parent=1 // pred_region
      %s14 = ssub.s32 128, 128
      %15 = vsyncadd [#allocation3], %s14
      %s16 = sshll.u32 [#allocation2], 4
      %s17 = int_to_ptr.vmem [resolvable:$true] %s16
      %22 = dma.hbm_to_vmem [thread:$0]  %s0, 128, %s17, [#allocation3], 64, 64, 4
    $region5: #{tpu_custom_call.1} parent=1 // pred_fallthru
      _
    // Predicated region
    $region6: #{tpu_custom_call.1} parent=1 // pred_check
      _
    $region7: #{tpu_custom_call.1} parent=1 // pred_check_branch
      %24 = sbr.rel (0) target = $region9
    $region8: #{tpu_custom_call.1} parent=1 // pred_region
      %s26 = ssub.s32 1024, 1024
      %27 = vsyncadd [#allocation6], %s26
      %s28 = sshll.u32 [#allocation5], 4
      %s29 = int_to_ptr.vmem [resolvable:$true] %s28
      %34 = dma.hbm_to_vmem [thread:$0]  %s1, 1024, %s29, [#allocation6], 64, 64, 4
    $region9: #{tpu_custom_call.1} parent=1 // pred_fallthru
      _
    // Predicated region
    $region10: #{tpu_custom_call.1} parent=1 // pred_check
      _
    $region11: #{tpu_custom_call.1} parent=1 // pred_check_branch
      %36 = sbr.rel (0) target = $region13
    $region12: #{tpu_custom_call.1} parent=1 // pred_region
      _
    $region13: #{tpu_custom_call.1} parent=1 // pred_fallthru
      _
    // Predicated region
    $region14: #{tpu_custom_call.1} parent=1 // pred_check
      _
    $region15: #{tpu_custom_call.1} parent=1 // pred_check_branch
      %38 = sbr.rel (0) target = $region17
    $region16: #{tpu_custom_call.1} parent=1 // pred_region
      %39 = dma.done [#allocation3], 128
    $region17: #{tpu_custom_call.1} parent=1 // pred_fallthru
      _
    // Predicated region
    $region18: #{tpu_custom_call.1} parent=1 // pred_check
      _
    $region19: #{tpu_custom_call.1} parent=1 // pred_check_branch
      %41 = sbr.rel (0) target = $region21
    $region20: #{tpu_custom_call.1} parent=1 // pred_region
      %42 = dma.done [#allocation6], 1024
    $region21: #{tpu_custom_call.1} parent=1 // pred_fallthru
      _
    %v44 = vld [vmem:[#allocation2] sm:$0xf]
    %v45 = vld [vmem:[#allocation2 + $0x4] sm:$0xf]
    %v46 = vld [vmem:[#allocation5] sm:$0xf]
    %v47 = vld [vmem:[#allocation5 + $0x4] sm:$0xf]
    %v48 = vld [vmem:[#allocation5 + $0x8] sm:$0xf]
    %v49 = vld [vmem:[#allocation5 + $0xc] sm:$0xf]
    %v50 = vld [vmem:[#allocation5 + $0x10] sm:$0xf]
    %v51 = vld [vmem:[#allocation5 + $0x14] sm:$0xf]
    %v52 = vld [vmem:[#allocation5 + $0x18] sm:$0xf]
    %v53 = vld [vmem:[#allocation5 + $0x1c] sm:$0xf]
    %v54 = vld [vmem:[#allocation5 + $0x20] sm:$0xf]
    %v55 = vld [vmem:[#allocation5 + $0x24] sm:$0xf]
    %v56 = vld [vmem:[#allocation5 + $0x28] sm:$0xf]
    %v57 = vld [vmem:[#allocation5 + $0x2c] sm:$0xf]
    %v58 = vld [vmem:[#allocation5 + $0x30] sm:$0xf]
    %v59 = vld [vmem:[#allocation5 + $0x34] sm:$0xf]
    %v60 = vld [vmem:[#allocation5 + $0x38] sm:$0xf]
    %v61 = vld [vmem:[#allocation5 + $0x3c] sm:$0xf]
    %v64 = vunpack.c.l.b16 %v44
    %v65 = vunpack.c.l.b16 %v45
    %v66 = vpack.c.b16 %v65, %v64
    %v84 = vunpack.c.l.b16 %v46
    %v85 = vunpack.c.l.b16 %v47
    %v86 = vunpack.c.l.b16 %v48
    %v87 = vunpack.c.l.b16 %v49
    %v88 = vunpack.c.l.b16 %v50
    %v89 = vunpack.c.l.b16 %v51
    %v90 = vunpack.c.l.b16 %v52
    %v91 = vunpack.c.l.b16 %v53
    %v92 = vunpack.c.l.b16 %v54
    %v93 = vunpack.c.l.b16 %v55
    %v94 = vunpack.c.l.b16 %v56
    %v95 = vunpack.c.l.b16 %v57
    %v96 = vunpack.c.l.b16 %v58
    %v97 = vunpack.c.l.b16 %v59
    %v98 = vunpack.c.l.b16 %v60
    %v99 = vunpack.c.l.b16 %v61
    %v100 = vpack.c.b16 %v85, %v84
    %v101 = vpack.c.b16 %v87, %v86
    %v102 = vpack.c.b16 %v89, %v88
    %v103 = vpack.c.b16 %v91, %v90
    %v104 = vpack.c.b16 %v93, %v92
    %v105 = vpack.c.b16 %v95, %v94
    %v106 = vpack.c.b16 %v97, %v96
    %v107 = vpack.c.b16 %v99, %v98
    %116 = vmatprep.subr.bf16.mxu0 0
    %117 = vmatpush1.bf16.msra.mxu0 %v100
    %118 = vmatprep.subr.bf16.mxu0 0
    %119 = vmatpush1.bf16.msra.mxu0 %v101
    %120 = vmatprep.subr.bf16.mxu0 0
    %121 = vmatpush1.bf16.msra.mxu0 %v102
    %122 = vmatprep.subr.bf16.mxu0 0
    %123 = vmatpush1.bf16.msra.mxu0 %v103
    %124 = vmatprep.subr.bf16.mxu0 0
    %125 = vmatpush1.bf16.msra.mxu0 %v104
    %126 = vmatprep.subr.bf16.mxu0 0
    %127 = vmatpush1.bf16.msra.mxu0 %v105
    %128 = vmatprep.subr.bf16.mxu0 0
    %129 = vmatpush1.bf16.msra.mxu0 %v106
    %130 = vmatprep.subr.bf16.mxu0 0
    %131 = vmatpush1.bf16.msra.mxu0 %v107
    %132 = vmatprep.subr.bf16.mxu0 0
    %133 = vmatpush1.bf16.msra.mxu0 0
    %134 = vmatprep.subr.bf16.mxu0 0
    %135 = vmatpush1.bf16.msra.mxu0 0
    %136 = vmatprep.subr.bf16.mxu0 0
    %137 = vmatpush1.bf16.msra.mxu0 0
    %138 = vmatprep.subr.bf16.mxu0 0
    %139 = vmatpush1.bf16.msra.mxu0 0
    %140 = vmatprep.subr.bf16.mxu0 0
    %141 = vmatpush1.bf16.msra.mxu0 0
    %142 = vmatprep.subr.bf16.mxu0 0
    %143 = vmatpush1.bf16.msra.mxu0 0
    %144 = vmatprep.subr.bf16.mxu0 0
    %145 = vmatpush1.bf16.msra.mxu0 0
    %146 = vmatprep.subr.bf16.mxu0 0
    %147 = vmatpush1.bf16.msra.mxu0 0
    %148 = vmatprep.mubr.bf16.mxu0 0
    %149 = vmatmul.mubr.bf16.gmra.mrb[0].mxu0 %v66
    %v150 = vpop.f32.mrb[0].mxu0
    %v151 = vadd.f32 0.0, %v150
    %v152 = vpop.f32.mrb[0].mxu0
    %v153 = vpop.f32.mrb[0].mxu0
    %v154 = vadd.f32 0.0, %v153
    %v155 = vpop.f32.mrb[0].mxu0
    %156 = vdwg.mxu0
    %p157 = scmp.eq.s32.totalorder 0, 0
    // Predicated region
    $region22: #{tpu_custom_call.1} parent=1 // pred_check
      %p158 = pneg %p157
    $region23: #{tpu_custom_call.1} parent=1 // pred_check_branch
      %160 = sbr.rel (%p158) target = $region25
    $region24: #{tpu_custom_call.1} parent=1 // pred_region
      %161 = vst [vmem:[#allocation7] sm:$0xff] %v151
      %162 = vst [vmem:[#allocation7 + $0x8] sm:$0xff] %v154
    $region25: #{tpu_custom_call.1} parent=1 // pred_fallthru
      _
    %p163 = scmp.ne.s32.totalorder 0, 0
    // Predicated region
    $region26: #{tpu_custom_call.1} parent=1 // pred_check
      %p164 = pneg %p163
    $region27: #{tpu_custom_call.1} parent=1 // pred_check_branch
      %166 = sbr.rel (%p164) target = $region29
    $region28: #{tpu_custom_call.1} parent=1 // pred_region
      %v167 = vld [vmem:[#allocation7] sm:$0xff]
      %v168 = vld [vmem:[#allocation7 + $0x8] sm:$0xff]
      %v169 = vadd.f32 %v167, %v151
      %v170 = vadd.f32 %v168, %v154
      %171 = vst [vmem:[#allocation7] sm:$0xff] %v169
      %172 = vst [vmem:[#allocation7 + $0x8] sm:$0xff] %v170
    $region29: #{tpu_custom_call.1} parent=1 // pred_fallthru
      _
    // Predicated region
    $region30: #{tpu_custom_call.1} parent=1 // pred_check
      %p173 = pneg %p157
    $region31: #{tpu_custom_call.1} parent=1 // pred_check_branch
      %175 = sbr.rel (%p173) target = $region33
    $region32: #{tpu_custom_call.1} parent=1 // pred_region
      %v176 = vld [vmem:[#allocation7] sm:$0xff]
      %v177 = vld [vmem:[#allocation7 + $0x8] sm:$0xff]
      %v178 = vld [vmem:[%s2] sm:$0x1]
      %v180 = vlaneseq
      %v181 = vshrl.u32 %v180, 7
      %v182 = vsub.s32 0, %v181
      %v183 = vrot.slane %v178, %v182
      %v185 = vadd.f32 %v176, %v183
      %v186 = vadd.f32 %v177, %v183
      %v187 = vmax.f32 %v185, 0.0
      %v188 = vmax.f32 %v186, 0.0
      %189 = vst [vmem:[#allocation7] sm:$0xff] %v187
      %190 = vst [vmem:[#allocation7 + $0x8] sm:$0xff] %v188
    $region33: #{tpu_custom_call.1} parent=1 // pred_fallthru
      _
    // Predicated region
    $region34: #{tpu_custom_call.1} parent=1 // pred_check
      _
    $region35: #{tpu_custom_call.1} parent=1 // pred_check_branch
      %192 = sbr.rel (0) target = $region37
    $region36: #{tpu_custom_call.1} parent=1 // pred_region
      %s194 = ssub.s32 256, 256
      %195 = vsyncadd [#allocation4], %s194
      %s196 = sshll.u32 [#allocation7], 4
      %s197 = int_to_ptr.vmem [resolvable:$true] %s196
      %202 = dma.vmem_to_hbm [thread:$0]  %s197, 256, %s3, [#allocation4], 128, 128, 8
    $region37: #{tpu_custom_call.1} parent=1 // pred_fallthru
      _
    // Predicated region
    $region38: #{tpu_custom_call.1} parent=1 // pred_check
      _
    $region39: #{tpu_custom_call.1} parent=1 // pred_check_branch
      %204 = sbr.rel (0) target = $region41
    $region40: #{tpu_custom_call.1} parent=1 // pred_region
      %205 = dma.done [#allocation4], 256
    $region41: #{tpu_custom_call.1} parent=1 // pred_fallthru
      _
    %206 = vsyncpa [#allocation3], 1
    %207 = vsyncpa [#allocation6], 1
    %208 = vsyncpa [#allocation4], 1

</llo_original>
